<compile_context>
chip_gen: v7x
topology: tpu7x:2x2x1
jax: 0.10.0
libtpu: 0.0.40
codegen_flags: <defaults>
</compile_context>

<pallas_src>
import math

import jax
import jax.numpy as jnp
from jax.experimental import pallas as pl
from jax.experimental.pallas import tpu as pltpu

HIDDEN1 = 512
HIDDEN2 = 64
PAD_ACTIONS = 128                  # lane-dense output width (multiple of 128)
NEG_BIG = -1e30                    # bias pad value: exp underflows to exactly 0
VMEM_LIMIT_BYTES = 48 * 1024 * 1024


def policy_kernel(x_ref, w1_ref, b1_ref, w2_ref, b2_ref, w3_ref, b3_ref, out_ref):
    """One batch tile: 3 matmuls (f32 accumulation) + ReLU + row softmax.

    The action dimension of w3/b3/out is pre-padded to PAD_ACTIONS lanes at
    the wrapper; padded logits are ~-1e30 so they contribute exactly 0 to the
    softmax and the output stores are full-width (unmasked) vector stores.
    """
    x = x_ref[...]

    # affine1 + ReLU (bias/activation in f32)
    h1 = jnp.dot(x, w1_ref[...], preferred_element_type=jnp.float32) + b1_ref[...]
    h1 = jnp.maximum(h1, 0.0)

    # affine2 + ReLU (cast to the weight dtype only at the MXU input)
    h2 = jnp.dot(h1.astype(w2_ref.dtype), w2_ref[...],
                 preferred_element_type=jnp.float32) + b2_ref[...]
    h2 = jnp.maximum(h2, 0.0)

    # affine3 (action scores, lane-padded to PAD_ACTIONS)
    logits = jnp.dot(h2.astype(w3_ref.dtype), w3_ref[...],
                     preferred_element_type=jnp.float32) + b3_ref[...]

    # softmax over dim=1 (action dimension), numerically stabilized, f32,
    # exact normalization (rows sum to 1 to f32 precision).
    m = jnp.max(logits, axis=1, keepdims=True)
    e = jnp.exp(logits - m)
    s = jnp.sum(e, axis=1, keepdims=True)
    out_ref[...] = (e / s).astype(out_ref.dtype)


def _batch_axis_semantics(num_tiles):
    """CORE_PARALLEL on v7x (2 TCs/chip) when there is work to split; plain
    'parallel' on single-TC v5e/v6e (near-zero codegen effect, but harmless)."""
    try:
        kind = jax.devices()[0].device_kind.lower()
    except Exception:  # pragma: no cover - defensive
        kind = ""
    if num_tiles >= 2 and "v7" in kind and hasattr(pltpu, "CORE_PARALLEL"):
        return (pltpu.CORE_PARALLEL,)
    return ("parallel",)


def policy_forward(x, params, *, block_batch=2048, use_bf16=True,
                   vmem_limit_bytes=VMEM_LIMIT_BYTES,
                   xla_small_batch_threshold=0):
    """Batch-tiled Pallas forward pass. Weights stay resident in VMEM."""
    w1, b1, w2, b2, w3, b3 = params
    batch, state_dim = x.shape
    action_dim = w3.shape[1]

    # Optional dispatch to plain XLA for tiny batches (pure launch overhead
    # otherwise).  Disabled by default so the kernel path is always taken.
    if batch <= xla_small_batch_threshold:
        return policy_reference(x, params)

    # Lane-dense output: pad the action dimension of W3/b3 to PAD_ACTIONS.
    # Padded weight columns are zero; padded bias entries are -1e30 so the
    # corresponding exp() is exactly 0 and the softmax over 128 lanes equals
    # the softmax over the real `action_dim` lanes.
    w3p = jnp.zeros((w3.shape[0], PAD_ACTIONS), w3.dtype).at[:, :action_dim].set(w3)
    b3p = jnp.full((1, PAD_ACTIONS), NEG_BIG, b3.dtype).at[:, :action_dim].set(b3)

    if use_bf16:
        # Halve HBM bytes for the streamed operand + weights; bf16 MXU path.
        # Biases / activations / softmax remain f32 inside the kernel.
        x = x.astype(jnp.bfloat16)
        w1 = w1.astype(jnp.bfloat16)
        w2 = w2.astype(jnp.bfloat16)
        w3p = w3p.astype(jnp.bfloat16)

    # Batch tile: large (>=1024 preferred) to amortize per-step grid overhead.
    # If the whole batch is smaller than one tile, use the full batch (legal:
    # block dim equal to the full array dim).
    tb = batch if batch <= block_batch else block_batch
    num_tiles = pl.cdiv(batch, tb)
    grid = (num_tiles,)

    # Weights/biases: same block every grid step -> DMA'd once, VMEM-resident.
    # (Default double-buffering of these residents costs only ~0.3 MB, which
    # is already accounted for in the 48 MiB VMEM budget.)
    resident = lambda i: (0, 0)
    in_specs = [
        pl.BlockSpec((tb, state_dim), lambda i: (i, 0)),   # x: streamed per tile
        pl.BlockSpec(w1.shape, resident),
        pl.BlockSpec(b1.shape, resident),
        pl.BlockSpec(w2.shape, resident),
        pl.BlockSpec(b2.shape, resident),
        pl.BlockSpec(w3p.shape, resident),
        pl.BlockSpec(b3p.shape, resident),
    ]
    out_specs = pl.BlockSpec((tb, PAD_ACTIONS), lambda i: (i, 0))

    flops = 2 * batch * (state_dim * HIDDEN1 + HIDDEN1 * HIDDEN2
                         + HIDDEN2 * PAD_ACTIONS)
    bytes_accessed = int(
        x.size * x.dtype.itemsize
        + sum(a.size * a.dtype.itemsize for a in (w1, b1, w2, b2, w3p, b3p))
        + batch * PAD_ACTIONS * 4
    )
    cost = pl.CostEstimate(flops=flops,
                           transcendentals=batch * PAD_ACTIONS,
                           bytes_accessed=bytes_accessed)

    out_padded = pl.pallas_call(
        policy_kernel,
        out_shape=jax.ShapeDtypeStruct((batch, PAD_ACTIONS), jnp.float32),
        grid=grid,
        in_specs=in_specs,
        out_specs=out_specs,
        compiler_params=pltpu.CompilerParams(
            dimension_semantics=_batch_axis_semantics(num_tiles),
            vmem_limit_bytes=vmem_limit_bytes),
        cost_estimate=cost,
    )(x, w1, b1, w2, b2, w3p, b3p)

    # Drop the lane padding -> (batch, action_dim) probabilities.
    return out_padded[:, :action_dim]


def init_linear(key, in_features, out_features):
    """PyTorch nn.Linear default init: U(-1/sqrt(fan_in), 1/sqrt(fan_in))."""
    kw, kb = jax.random.split(key)
    bound = 1.0 / math.sqrt(in_features)
    # stored transposed vs. PyTorch: (in, out) so the kernel does x @ W
    w = jax.random.uniform(kw, (in_features, out_features), jnp.float32, -bound, bound)
    b = jax.random.uniform(kb, (1, out_features), jnp.float32, -bound, bound)
    return w, b


def init_policy_params(key, state_dim, action_dim):
    k1, k2, k3 = jax.random.split(key, 3)
    w1, b1 = init_linear(k1, state_dim, HIDDEN1)
    w2, b2 = init_linear(k2, HIDDEN1, HIDDEN2)
    w3, b3 = init_linear(k3, HIDDEN2, action_dim)
    return (w1, b1, w2, b2, w3, b3)


def policy_reference(x, params):
    """Pure-JAX reference for correctness checking."""
    w1, b1, w2, b2, w3, b3 = params
    h1 = jnp.maximum(x @ w1 + b1, 0.0)
    h2 = jnp.maximum(h1 @ w2 + b2, 0.0)
    logits = h2 @ w3 + b3
    return jax.nn.softmax(logits, axis=1)


if __name__ == "__main__":
    state_dim, action_dim = 8, 4

    key = jax.random.PRNGKey(0)
    key_p, key_x1, key_x2, key_x3 = jax.random.split(key, 4)
    params = init_policy_params(key_p, state_dim, action_dim)

    # 1) Tiny batch consistent with the module, f32 path (single-tile grid).
    x_small = jax.random.normal(key_x1, (2, state_dim), jnp.float32)
    out_small = jax.block_until_ready(
        policy_forward(x_small, params, use_bf16=False))
    ref_small = policy_reference(x_small, params)
    assert out_small.shape == (2, action_dim)
    assert jnp.allclose(jnp.sum(out_small, axis=1), 1.0, atol=1e-4)
    assert jnp.allclose(out_small, ref_small, atol=1e-3, rtol=1e-3)

    # 2) Multi-tile grid with a ragged last tile (384 rows, 256-row tiles),
    #    f32 path: exercises masked writeback of the partial block.
    x_big = jax.random.normal(key_x2, (384, state_dim), jnp.float32)
    out_big = jax.block_until_ready(
        policy_forward(x_big, params, block_batch=256, use_bf16=False))
    ref_big = policy_reference(x_big, params)
    assert jnp.allclose(out_big, ref_big, atol=1e-3, rtol=1e-3)

    # 3) Default bf16 MXU path (f32 accumulation / f32 softmax), 2-tile grid,
    #    looser tolerance for the bf16 operand quantization.
    x_bf = jax.random.normal(key_x3, (512, state_dim), jnp.float32)
    out_bf = jax.block_until_ready(
        policy_forward(x_bf, params, block_batch=256))
    ref_bf = policy_reference(x_bf, params)
    assert jnp.allclose(jnp.sum(out_bf, axis=1), 1.0, atol=5e-3)
    assert jnp.allclose(out_bf, ref_bf, atol=3e-2, rtol=3e-2)

    print("KERNEL_OK")
</pallas_src>

<mosaic_0001>
module attributes {stable_mosaic.version = 11 : i64} {
  func.func @policy_kernel(%arg0: i32, %arg1: memref<2x8xf32, #tpu.memory_space<vmem>>, %arg2: memref<8x512xf32, #tpu.memory_space<vmem>>, %arg3: memref<1x512xf32, #tpu.memory_space<vmem>>, %arg4: memref<512x64xf32, #tpu.memory_space<vmem>>, %arg5: memref<1x64xf32, #tpu.memory_space<vmem>>, %arg6: memref<64x128xf32, #tpu.memory_space<vmem>>, %arg7: memref<1x128xf32, #tpu.memory_space<vmem>>, %arg8: memref<2x128xf32, #tpu.memory_space<vmem>>) attributes {dimension_semantics = [#tpu.dimension_semantics<parallel>], iteration_bounds = array<i64: 1>, scalar_prefetch = 0 : i64, scratch_operands = 0 : i64, tpu.core_type = #tpu.core_type<tc>, window_params = [{transform_indices = @transform_0, window_bounds = array<i64: 2, 8>}, {pipeline_mode = #tpu.pipeline_mode<synchronous>, transform_indices = @transform_1, window_bounds = array<i64: 8, 512>}, {pipeline_mode = #tpu.pipeline_mode<synchronous>, transform_indices = @transform_2, window_bounds = array<i64: 1, 512>}, {pipeline_mode = #tpu.pipeline_mode<synchronous>, transform_indices = @transform_3, window_bounds = array<i64: 512, 64>}, {pipeline_mode = #tpu.pipeline_mode<synchronous>, transform_indices = @transform_4, window_bounds = array<i64: 1, 64>}, {pipeline_mode = #tpu.pipeline_mode<synchronous>, transform_indices = @transform_5, window_bounds = array<i64: 64, 128>}, {pipeline_mode = #tpu.pipeline_mode<synchronous>, transform_indices = @transform_6, window_bounds = array<i64: 1, 128>}, {transform_indices = @transform_7, window_bounds = array<i64: 2, 128>}]} {
    %c0 = arith.constant 0 : index
    %c0_0 = arith.constant 0 : index
    %0 = vector.load %arg1[%c0, %c0_0] : memref<2x8xf32, #tpu.memory_space<vmem>>, vector<2x8xf32>
    %c0_1 = arith.constant 0 : index
    %c0_2 = arith.constant 0 : index
    %1 = vector.load %arg2[%c0_1, %c0_2] : memref<8x512xf32, #tpu.memory_space<vmem>>, vector<8x512xf32>
    %cst = arith.constant dense<0.000000e+00> : vector<2x512xf32>
    %2 = tpu.matmul %0, %1, %cst {dimension_numbers = #tpu.dot_dimension_numbers<[1], [0], [0], [1], [0, 0, 1, 1], [], []>} : vector<2x8xf32>, vector<8x512xf32>, vector<2x512xf32> -> vector<2x512xf32>
    %c0_3 = arith.constant 0 : index
    %c0_4 = arith.constant 0 : index
    %3 = vector.load %arg3[%c0_3, %c0_4] : memref<1x512xf32, #tpu.memory_space<vmem>>, vector<1x512xf32>
    %4 = vector.broadcast %3 : vector<1x512xf32> to vector<2x512xf32>
    %5 = arith.addf %2, %4 : vector<2x512xf32>
    %cst_5 = arith.constant 0.000000e+00 : f32
    %6 = vector.broadcast %cst_5 : f32 to vector<2x512xf32>
    %7 = arith.maximumf %5, %6 : vector<2x512xf32>
    %c0_6 = arith.constant 0 : index
    %c0_7 = arith.constant 0 : index
    %8 = vector.load %arg4[%c0_6, %c0_7] : memref<512x64xf32, #tpu.memory_space<vmem>>, vector<512x64xf32>
    %cst_8 = arith.constant dense<0.000000e+00> : vector<2x64xf32>
    %9 = tpu.matmul %7, %8, %cst_8 {dimension_numbers = #tpu.dot_dimension_numbers<[1], [0], [0], [1], [0, 0, 1, 1], [], []>} : vector<2x512xf32>, vector<512x64xf32>, vector<2x64xf32> -> vector<2x64xf32>
    %c0_9 = arith.constant 0 : index
    %c0_10 = arith.constant 0 : index
    %10 = vector.load %arg5[%c0_9, %c0_10] : memref<1x64xf32, #tpu.memory_space<vmem>>, vector<1x64xf32>
    %11 = vector.broadcast %10 : vector<1x64xf32> to vector<2x64xf32>
    %12 = arith.addf %9, %11 : vector<2x64xf32>
    %cst_11 = arith.constant 0.000000e+00 : f32
    %13 = vector.broadcast %cst_11 : f32 to vector<2x64xf32>
    %14 = arith.maximumf %12, %13 : vector<2x64xf32>
    %c0_12 = arith.constant 0 : index
    %c0_13 = arith.constant 0 : index
    %15 = vector.load %arg6[%c0_12, %c0_13] : memref<64x128xf32, #tpu.memory_space<vmem>>, vector<64x128xf32>
    %cst_14 = arith.constant dense<0.000000e+00> : vector<2x128xf32>
    %16 = tpu.matmul %14, %15, %cst_14 {dimension_numbers = #tpu.dot_dimension_numbers<[1], [0], [0], [1], [0, 0, 1, 1], [], []>} : vector<2x64xf32>, vector<64x128xf32>, vector<2x128xf32> -> vector<2x128xf32>
    %c0_15 = arith.constant 0 : index
    %c0_16 = arith.constant 0 : index
    %17 = vector.load %arg7[%c0_15, %c0_16] : memref<1x128xf32, #tpu.memory_space<vmem>>, vector<1x128xf32>
    %18 = vector.broadcast %17 : vector<1x128xf32> to vector<2x128xf32>
    %19 = arith.addf %16, %18 : vector<2x128xf32>
    %cst_17 = arith.constant dense<0xFF800000> : vector<2xf32>
    %20 = vector.multi_reduction <maximumf>, %19, %cst_17 [1] : vector<2x128xf32> to vector<2xf32>
    %21 = vector.shape_cast %20 : vector<2xf32> to vector<2x1xf32>
    %22 = vector.broadcast %21 : vector<2x1xf32> to vector<2x128xf32>
    %23 = arith.subf %19, %22 : vector<2x128xf32>
    %24 = math.exp %23 : vector<2x128xf32>
    %cst_18 = arith.constant dense<0.000000e+00> : vector<2xf32>
    %25 = vector.multi_reduction <add>, %24, %cst_18 [1] : vector<2x128xf32> to vector<2xf32>
    %26 = vector.shape_cast %25 : vector<2xf32> to vector<2x1xf32>
    %27 = vector.broadcast %26 : vector<2x1xf32> to vector<2x128xf32>
    %28 = arith.divf %24, %27 : vector<2x128xf32>
    %c0_19 = arith.constant 0 : index
    %c0_20 = arith.constant 0 : index
    %29 = vector.load %arg8[%c0_19, %c0_20] : memref<2x128xf32, #tpu.memory_space<vmem>>, vector<2x128xf32>
    tpu.vector_store %arg8[%c0_19, %c0_20], %28 {strides = array<i32>} : memref<2x128xf32, #tpu.memory_space<vmem>>, vector<2x128xf32>,
    return
  }
  func.func @transform_0(%arg0: i32) -> (i32, i32) {
    %c0_i32 = arith.constant 0 : i32
    %c0_i32_0 = arith.constant 0 : i32
    return %arg0, %c0_i32 : i32, i32
  }
  func.func @transform_1(%arg0: i32) -> (i32, i32) {
    %c0_i32 = arith.constant 0 : i32
    %c0_i32_0 = arith.constant 0 : i32
    %c0_i32_1 = arith.constant 0 : i32
    return %c0_i32, %c0_i32_0 : i32, i32
  }
  func.func @transform_2(%arg0: i32) -> (i32, i32) {
    %c0_i32 = arith.constant 0 : i32
    %c0_i32_0 = arith.constant 0 : i32
    %c0_i32_1 = arith.constant 0 : i32
    return %c0_i32, %c0_i32_0 : i32, i32
  }
  func.func @transform_3(%arg0: i32) -> (i32, i32) {
    %c0_i32 = arith.constant 0 : i32
    %c0_i32_0 = arith.constant 0 : i32
    %c0_i32_1 = arith.constant 0 : i32
    return %c0_i32, %c0_i32_0 : i32, i32
  }
  func.func @transform_4(%arg0: i32) -> (i32, i32) {
    %c0_i32 = arith.constant 0 : i32
    %c0_i32_0 = arith.constant 0 : i32
    %c0_i32_1 = arith.constant 0 : i32
    return %c0_i32, %c0_i32_0 : i32, i32
  }
  func.func @transform_5(%arg0: i32) -> (i32, i32) {
    %c0_i32 = arith.constant 0 : i32
    %c0_i32_0 = arith.constant 0 : i32
    %c0_i32_1 = arith.constant 0 : i32
    return %c0_i32, %c0_i32_0 : i32, i32
  }
  func.func @transform_6(%arg0: i32) -> (i32, i32) {
    %c0_i32 = arith.constant 0 : i32
    %c0_i32_0 = arith.constant 0 : i32
    %c0_i32_1 = arith.constant 0 : i32
    return %c0_i32, %c0_i32_0 : i32, i32
  }
  func.func @transform_7(%arg0: i32) -> (i32, i32) {
    %c0_i32 = arith.constant 0 : i32
    %c0_i32_0 = arith.constant 0 : i32
    return %arg0, %c0_i32 : i32, i32
  }
}

</mosaic_0001>

<llo_original>
// kernel: tpu_custom_call.1
$region0: #{tpu_custom_call.1}
  #allocation0 [shape = 'u32[]', space=smem, size = 0x4, offset = 0x4, fixed_abs, tag = 'smem constant byte address 0x4 - core index']
  #allocation1 [shape = 'u32[144,128]{1,0:T(1,128)}', space=vmem, size = 0x12000, scoped, tag = 'internal scratch']
  %s0 = inlined_call_operand.vmem [shape: f32[2,8], index: 0, kind: input, shape index: {}]
  %s1 = inlined_call_operand.vmem [shape: f32[8,512], index: 1, kind: input, shape index: {}]
  %s2 = inlined_call_operand.vmem [shape: f32[1,512], index: 2, kind: input, shape index: {}]
  %s3 = inlined_call_operand.vmem [shape: f32[512,64], index: 3, kind: input, shape index: {}]
  %s4 = inlined_call_operand.vmem [shape: f32[1,64], index: 4, kind: input, shape index: {}]
  %s5 = inlined_call_operand.vmem [shape: f32[64,128], index: 5, kind: input, shape index: {}]
  %s6 = inlined_call_operand.vmem [shape: f32[1,128], index: 6, kind: input, shape index: {}]
  %s7 = inlined_call_operand.hbm [shape: f32[2,128], index: 7, kind: output, shape index: {}]
  %s8 = sld [smem:[#allocation0]]
  $region38: #{tpu_custom_call.1} parent=0
    _
  %s10 = ssub.s32 1, %s8
  %s11 = scalar_select 0, %s10, %s8
  $region1: #{tpu_custom_call.1} parent=0
    #allocation2 [shape = 'u8[1024]{0}', space=vmem, size = 0x400, scoped, tag = 'output window, operand 0, single buffered']
    #allocation3 [shape = 's32[1]{0}', space=sflag, size = 0x4, scoped, tag = 'scoped memory for tpu_custom_call.1']
    %12 = vsyncpa [#allocation3], 0
    // Predicated region
    $region2: #{tpu_custom_call.1} parent=1 // pred_check
      _
    $region3: #{tpu_custom_call.1} parent=1 // pred_check_branch
      %14 = sbr.rel (0) target = $region5
    $region4: #{tpu_custom_call.1} parent=1 // pred_region
      _
    $region5: #{tpu_custom_call.1} parent=1 // pred_fallthru
      _
    // Predicated region
    $region6: #{tpu_custom_call.1} parent=1 // pred_check
      _
    $region7: #{tpu_custom_call.1} parent=1 // pred_check_branch
      %16 = sbr.rel (0) target = $region9
    $region8: #{tpu_custom_call.1} parent=1 // pred_region
      _
    $region9: #{tpu_custom_call.1} parent=1 // pred_fallthru
      _
    // Predicated region
    $region10: #{tpu_custom_call.1} parent=1 // pred_check
      _
    $region11: #{tpu_custom_call.1} parent=1 // pred_check_branch
      %18 = sbr.rel (0) target = $region13
    $region12: #{tpu_custom_call.1} parent=1 // pred_region
      _
    $region13: #{tpu_custom_call.1} parent=1 // pred_fallthru
      _
    // Predicated region
    $region14: #{tpu_custom_call.1} parent=1 // pred_check
      _
    $region15: #{tpu_custom_call.1} parent=1 // pred_check_branch
      %20 = sbr.rel (0) target = $region17
    $region16: #{tpu_custom_call.1} parent=1 // pred_region
      _
    $region17: #{tpu_custom_call.1} parent=1 // pred_fallthru
      _
    // Predicated region
    $region18: #{tpu_custom_call.1} parent=1 // pred_check
      _
    $region19: #{tpu_custom_call.1} parent=1 // pred_check_branch
      %22 = sbr.rel (0) target = $region21
    $region20: #{tpu_custom_call.1} parent=1 // pred_region
      _
    $region21: #{tpu_custom_call.1} parent=1 // pred_fallthru
      _
    // Predicated region
    $region22: #{tpu_custom_call.1} parent=1 // pred_check
      _
    $region23: #{tpu_custom_call.1} parent=1 // pred_check_branch
      %24 = sbr.rel (0) target = $region25
    $region24: #{tpu_custom_call.1} parent=1 // pred_region
      _
    $region25: #{tpu_custom_call.1} parent=1 // pred_fallthru
      _
    // Predicated region
    $region26: #{tpu_custom_call.1} parent=1 // pred_check
      _
    $region27: #{tpu_custom_call.1} parent=1 // pred_check_branch
      %26 = sbr.rel (0) target = $region29
    $region28: #{tpu_custom_call.1} parent=1 // pred_region
      _
    $region29: #{tpu_custom_call.1} parent=1 // pred_fallthru
      _
    %v27 = vld [vmem:[%s0] sm:$0x3]
    %v28 = vld [vmem:[%s1] sm:$0xff]
    %v29 = vld [vmem:[%s1 + $0x8] sm:$0xff]
    %v30 = vld [vmem:[%s1 + $0x10] sm:$0xff]
    %v31 = vld [vmem:[%s1 + $0x18] sm:$0xff]
    %v32 = vld [vmem:[%s2] sm:$0xf]
    %v34 = vlaneseq
    %v35 = vshrl.u32 %v34, 7
    %v36 = vsub.s32 0, %v35
    %v37 = vrot.slane %v32, %v36
    %v38 = vlaneseq
    %v39 = vshrl.u32 %v38, 7
    %v40 = vsub.s32 1, %v39
    %v41 = vrot.slane %v32, %v40
    %v42 = vlaneseq
    %v43 = vshrl.u32 %v42, 7
    %v44 = vsub.s32 2, %v43
    %v45 = vrot.slane %v32, %v44
    %v46 = vlaneseq
    %v47 = vshrl.u32 %v46, 7
    %v48 = vsub.s32 3, %v47
    %v49 = vrot.slane %v32, %v48
    %vm54 = vcmask 64512
    %v56 = vsel %vm54, %v27, 0
    %58 = vmatprep.subr.mxu0 %v29
    %59 = vmatpush1.msra.mxu0 %v28
    %60 = vmatprep.subr.mxu0 0.0
    %61 = vmatpush1.msra.mxu0 0.0
    %62 = vmatprep.subr.mxu0 0.0
    %63 = vmatpush1.msra.mxu0 0.0
    %64 = vmatprep.subr.mxu0 0.0
    %65 = vmatpush1.msra.mxu0 0.0
    %66 = vmatprep.subr.mxu0 0.0
    %67 = vmatpush1.msra.mxu0 0.0
    %68 = vmatprep.subr.mxu0 0.0
    %69 = vmatpush1.msra.mxu0 0.0
    %70 = vmatprep.subr.mxu0 0.0
    %71 = vmatpush1.msra.mxu0 0.0
    %72 = vmatprep.subr.mxu0 0.0
    %73 = vmatpush1.msra.mxu0 0.0
    %74 = vmatprep.subr.mxu0 0.0
    %75 = vmatpush1.msra.mxu0 0.0
    %76 = vmatprep.subr.mxu0 0.0
    %77 = vmatpush1.msra.mxu0 0.0
    %78 = vmatprep.subr.mxu0 0.0
    %79 = vmatpush1.msra.mxu0 0.0
    %80 = vmatprep.subr.mxu0 0.0
    %81 = vmatpush1.msra.mxu0 0.0
    %82 = vmatprep.subr.mxu0 0.0
    %83 = vmatpush1.msra.mxu0 0.0
    %84 = vmatprep.subr.mxu0 0.0
    %85 = vmatpush1.msra.mxu0 0.0
    %86 = vmatprep.subr.mxu0 0.0
    %87 = vmatpush1.msra.mxu0 0.0
    %88 = vmatprep.subr.mxu0 0.0
    %89 = vmatpush1.msra.mxu0 0.0
    %90 = vmatprep.subr.mxu0 0.0
    %91 = vmatpush1.msra.mxu0 0.0
    %92 = vmatprep.subr.mxu0 0.0
    %93 = vmatpush1.msra.mxu0 0.0
    %94 = vmatprep.subr.mxu0 0.0
    %95 = vmatpush1.msra.mxu0 0.0
    %96 = vmatprep.subr.mxu0 0.0
    %97 = vmatpush1.msra.mxu0 0.0
    %98 = vmatprep.subr.mxu0 0.0
    %99 = vmatpush1.msra.mxu0 0.0
    %100 = vmatprep.subr.mxu0 0.0
    %101 = vmatpush1.msra.mxu0 0.0
    %102 = vmatprep.subr.mxu0 0.0
    %103 = vmatpush1.msra.mxu0 0.0
    %104 = vmatprep.subr.mxu0 0.0
    %105 = vmatpush1.msra.mxu0 0.0
    %106 = vmatprep.subr.mxu0 0.0
    %107 = vmatpush1.msra.mxu0 0.0
    %108 = vmatprep.subr.mxu0 0.0
    %109 = vmatpush1.msra.mxu0 0.0
    %110 = vmatprep.subr.mxu0 0.0
    %111 = vmatpush1.msra.mxu0 0.0
    %112 = vmatprep.subr.mxu0 0.0
    %113 = vmatpush1.msra.mxu0 0.0
    %114 = vmatprep.subr.mxu0 0.0
    %115 = vmatpush1.msra.mxu0 0.0
    %116 = vmatprep.subr.mxu0 0.0
    %117 = vmatpush1.msra.mxu0 0.0
    %118 = vmatprep.subr.mxu0 0.0
    %119 = vmatpush1.msra.mxu0 0.0
    %120 = vmatprep.subr.mxu0 0.0
    %121 = vmatpush1.msra.mxu0 0.0
    %122 = vmatprep.mubr.f32.mxu0 0.0
    %123 = vmatmul.mubr.f32.gmra.mrb[0].mxu0 %v56
    %v124 = vpop.f32.mrb[0].mxu0
    %v125 = vadd.f32 %v37, %v124
    %v126 = vpop.f32.mrb[0].mxu0
    %v127 = vadd.f32 %v41, %v126
    %128 = vdwg.mxu0
    %129 = vmatprep.subr.mxu0 %v31
    %130 = vmatpush1.msra.mxu0 %v30
    %131 = vmatprep.subr.mxu0 0.0
    %132 = vmatpush1.msra.mxu0 0.0
    %133 = vmatprep.subr.mxu0 0.0
    %134 = vmatpush1.msra.mxu0 0.0
    %135 = vmatprep.subr.mxu0 0.0
    %136 = vmatpush1.msra.mxu0 0.0
    %137 = vmatprep.subr.mxu0 0.0
    %138 = vmatpush1.msra.mxu0 0.0
    %139 = vmatprep.subr.mxu0 0.0
    %140 = vmatpush1.msra.mxu0 0.0
    %141 = vmatprep.subr.mxu0 0.0
    %142 = vmatpush1.msra.mxu0 0.0
    %143 = vmatprep.subr.mxu0 0.0
    %144 = vmatpush1.msra.mxu0 0.0
    %145 = vmatprep.subr.mxu0 0.0
    %146 = vmatpush1.msra.mxu0 0.0
    %147 = vmatprep.subr.mxu0 0.0
    %148 = vmatpush1.msra.mxu0 0.0
    %149 = vmatprep.subr.mxu0 0.0
    %150 = vmatpush1.msra.mxu0 0.0
    %151 = vmatprep.subr.mxu0 0.0
    %152 = vmatpush1.msra.mxu0 0.0
    %153 = vmatprep.subr.mxu0 0.0
    %154 = vmatpush1.msra.mxu0 0.0
    %155 = vmatprep.subr.mxu0 0.0
    %156 = vmatpush1.msra.mxu0 0.0
    %157 = vmatprep.subr.mxu0 0.0
    %158 = vmatpush1.msra.mxu0 0.0
    %159 = vmatprep.subr.mxu0 0.0
    %160 = vmatpush1.msra.mxu0 0.0
    %161 = vmatprep.subr.mxu0 0.0
    %162 = vmatpush1.msra.mxu0 0.0
    %163 = vmatprep.subr.mxu0 0.0
    %164 = vmatpush1.msra.mxu0 0.0
    %165 = vmatprep.subr.mxu0 0.0
    %166 = vmatpush1.msra.mxu0 0.0
    %167 = vmatprep.subr.mxu0 0.0
    %168 = vmatpush1.msra.mxu0 0.0
    %169 = vmatprep.subr.mxu0 0.0
    %170 = vmatpush1.msra.mxu0 0.0
    %171 = vmatprep.subr.mxu0 0.0
    %172 = vmatpush1.msra.mxu0 0.0
    %173 = vmatprep.subr.mxu0 0.0
    %174 = vmatpush1.msra.mxu0 0.0
    %175 = vmatprep.subr.mxu0 0.0
    %176 = vmatpush1.msra.mxu0 0.0
    %177 = vmatprep.subr.mxu0 0.0
    %178 = vmatpush1.msra.mxu0 0.0
    %179 = vmatprep.subr.mxu0 0.0
    %180 = vmatpush1.msra.mxu0 0.0
    %181 = vmatprep.subr.mxu0 0.0
    %182 = vmatpush1.msra.mxu0 0.0
    %183 = vmatprep.subr.mxu0 0.0
    %184 = vmatpush1.msra.mxu0 0.0
    %185 = vmatprep.subr.mxu0 0.0
    %186 = vmatpush1.msra.mxu0 0.0
    %187 = vmatprep.subr.mxu0 0.0
    %188 = vmatpush1.msra.mxu0 0.0
    %189 = vmatprep.subr.mxu0 0.0
    %190 = vmatpush1.msra.mxu0 0.0
    %191 = vmatprep.subr.mxu0 0.0
    %192 = vmatpush1.msra.mxu0 0.0
    %193 = vmatprep.mubr.f32.mxu0 0.0
    %194 = vmatmul.mubr.f32.gmra.mrb[0].mxu0 %v56
    %v195 = vpop.f32.mrb[0].mxu0
    %v196 = vadd.f32 %v45, %v195
    %v197 = vpop.f32.mrb[0].mxu0
    %v198 = vadd.f32 %v49, %v197
    %199 = vdwg.mxu0
    %v200 = vmax.f32 %v125, 0.0
    %v201 = vmax.f32 %v127, 0.0
    %v202 = vmax.f32 %v196, 0.0
    %v203 = vmax.f32 %v198, 0.0
    %v204 = vld [vmem:[%s3] sm:$0xff]
    %v205 = vld [vmem:[%s3 + $0x8] sm:$0xff]
    %v206 = vld [vmem:[%s3 + $0x10] sm:$0xff]
    %v207 = vld [vmem:[%s3 + $0x18] sm:$0xff]
    %v208 = vld [vmem:[%s3 + $0x20] sm:$0xff]
    %v209 = vld [vmem:[%s3 + $0x28] sm:$0xff]
    %v210 = vld [vmem:[%s3 + $0x30] sm:$0xff]
    %v211 = vld [vmem:[%s3 + $0x38] sm:$0xff]
    %v212 = vld [vmem:[%s3 + $0x40] sm:$0xff]
    %v213 = vld [vmem:[%s3 + $0x48] sm:$0xff]
    %v214 = vld [vmem:[%s3 + $0x50] sm:$0xff]
    %v215 = vld [vmem:[%s3 + $0x58] sm:$0xff]
    %v216 = vld [vmem:[%s3 + $0x60] sm:$0xff]
    %v217 = vld [vmem:[%s3 + $0x68] sm:$0xff]
    %v218 = vld [vmem:[%s3 + $0x70] sm:$0xff]
    %v219 = vld [vmem:[%s3 + $0x78] sm:$0xff]
    %v220 = vld [vmem:[%s3 + $0x80] sm:$0xff]
    %v221 = vld [vmem:[%s3 + $0x88] sm:$0xff]
    %v222 = vld [vmem:[%s3 + $0x90] sm:$0xff]
    %v223 = vld [vmem:[%s3 + $0x98] sm:$0xff]
    %v224 = vld [vmem:[%s3 + $0xa0] sm:$0xff]
    %v225 = vld [vmem:[%s3 + $0xa8] sm:$0xff]
    %v226 = vld [vmem:[%s3 + $0xb0] sm:$0xff]
    %v227 = vld [vmem:[%s3 + $0xb8] sm:$0xff]
    %v228 = vld [vmem:[%s3 + $0xc0] sm:$0xff]
    %v229 = vld [vmem:[%s3 + $0xc8] sm:$0xff]
    %v230 = vld [vmem:[%s3 + $0xd0] sm:$0xff]
    %v231 = vld [vmem:[%s3 + $0xd8] sm:$0xff]
    %v232 = vld [vmem:[%s3 + $0xe0] sm:$0xff]
    %v233 = vld [vmem:[%s3 + $0xe8] sm:$0xff]
    %v234 = vld [vmem:[%s3 + $0xf0] sm:$0xff]
    %v235 = vld [vmem:[%s3 + $0xf8] sm:$0xff]
    %v236 = vld [vmem:[%s3 + $0x100] sm:$0xff]
    %v237 = vld [vmem:[%s3 + $0x108] sm:$0xff]
    %v238 = vld [vmem:[%s3 + $0x110] sm:$0xff]
    %v239 = vld [vmem:[%s3 + $0x118] sm:$0xff]
    %v240 = vld [vmem:[%s3 + $0x120] sm:$0xff]
    %v241 = vld [vmem:[%s3 + $0x128] sm:$0xff]
    %v242 = vld [vmem:[%s3 + $0x130] sm:$0xff]
    %v243 = vld [vmem:[%s3 + $0x138] sm:$0xff]
    %v244 = vld [vmem:[%s3 + $0x140] sm:$0xff]
    %v245 = vld [vmem:[%s3 + $0x148] sm:$0xff]
    %v246 = vld [vmem:[%s3 + $0x150] sm:$0xff]
    %v247 = vld [vmem:[%s3 + $0x158] sm:$0xff]
    %v248 = vld [vmem:[%s3 + $0x160] sm:$0xff]
    %v249 = vld [vmem:[%s3 + $0x168] sm:$0xff]
    %v250 = vld [vmem:[%s3 + $0x170] sm:$0xff]
    %v251 = vld [vmem:[%s3 + $0x178] sm:$0xff]
    %v252 = vld [vmem:[%s3 + $0x180] sm:$0xff]
    %v253 = vld [vmem:[%s3 + $0x188] sm:$0xff]
    %v254 = vld [vmem:[%s3 + $0x190] sm:$0xff]
    %v255 = vld [vmem:[%s3 + $0x198] sm:$0xff]
    %v256 = vld [vmem:[%s3 + $0x1a0] sm:$0xff]
    %v257 = vld [vmem:[%s3 + $0x1a8] sm:$0xff]
    %v258 = vld [vmem:[%s3 + $0x1b0] sm:$0xff]
    %v259 = vld [vmem:[%s3 + $0x1b8] sm:$0xff]
    %v260 = vld [vmem:[%s3 + $0x1c0] sm:$0xff]
    %v261 = vld [vmem:[%s3 + $0x1c8] sm:$0xff]
    %v262 = vld [vmem:[%s3 + $0x1d0] sm:$0xff]
    %v263 = vld [vmem:[%s3 + $0x1d8] sm:$0xff]
    %v264 = vld [vmem:[%s3 + $0x1e0] sm:$0xff]
    %v265 = vld [vmem:[%s3 + $0x1e8] sm:$0xff]
    %v266 = vld [vmem:[%s3 + $0x1f0] sm:$0xff]
    %v267 = vld [vmem:[%s3 + $0x1f8] sm:$0xff]
    %v268 = vld [vmem:[%s4] sm:$0x1]
    %v270 = vlaneseq
    %v271 = vshrl.u32 %v270, 7
    %v272 = vsub.s32 0, %v271
    %v273 = vrot.slane %v268, %v272
    %275 = vmatprep.subr.mxu0 0.0
    %276 = vmatpush1.msra.mxu0 %v204
    %277 = vmatprep.subr.mxu0 0.0
    %278 = vmatpush1.msra.mxu0 %v205
    %279 = vmatprep.subr.mxu0 0.0
    %280 = vmatpush1.msra.mxu0 %v206
    %281 = vmatprep.subr.mxu0 0.0
    %282 = vmatpush1.msra.mxu0 %v207
    %283 = vmatprep.subr.mxu0 0.0
    %284 = vmatpush1.msra.mxu0 %v208
    %285 = vmatprep.subr.mxu0 0.0
    %286 = vmatpush1.msra.mxu0 %v209
    %287 = vmatprep.subr.mxu0 0.0
    %288 = vmatpush1.msra.mxu0 %v210
    %289 = vmatprep.subr.mxu0 0.0
    %290 = vmatpush1.msra.mxu0 %v211
    %291 = vmatprep.subr.mxu0 0.0
    %292 = vmatpush1.msra.mxu0 %v212
    %293 = vmatprep.subr.mxu0 0.0
    %294 = vmatpush1.msra.mxu0 %v213
    %295 = vmatprep.subr.mxu0 0.0
    %296 = vmatpush1.msra.mxu0 %v214
    %297 = vmatprep.subr.mxu0 0.0
    %298 = vmatpush1.msra.mxu0 %v215
    %299 = vmatprep.subr.mxu0 0.0
    %300 = vmatpush1.msra.mxu0 %v216
    %301 = vmatprep.subr.mxu0 0.0
    %302 = vmatpush1.msra.mxu0 %v217
    %303 = vmatprep.subr.mxu0 0.0
    %304 = vmatpush1.msra.mxu0 %v218
    %305 = vmatprep.subr.mxu0 0.0
    %306 = vmatpush1.msra.mxu0 %v219
    %307 = vmatprep.subr.mxu0 0.0
    %308 = vmatpush1.msra.mxu0 %v220
    %309 = vmatprep.subr.mxu0 0.0
    %310 = vmatpush1.msra.mxu0 %v221
    %311 = vmatprep.subr.mxu0 0.0
    %312 = vmatpush1.msra.mxu0 %v222
    %313 = vmatprep.subr.mxu0 0.0
    %314 = vmatpush1.msra.mxu0 %v223
    %315 = vmatprep.subr.mxu0 0.0
    %316 = vmatpush1.msra.mxu0 %v224
    %317 = vmatprep.subr.mxu0 0.0
    %318 = vmatpush1.msra.mxu0 %v225
    %319 = vmatprep.subr.mxu0 0.0
    %320 = vmatpush1.msra.mxu0 %v226
    %321 = vmatprep.subr.mxu0 0.0
    %322 = vmatpush1.msra.mxu0 %v227
    %323 = vmatprep.subr.mxu0 0.0
    %324 = vmatpush1.msra.mxu0 %v228
    %325 = vmatprep.subr.mxu0 0.0
    %326 = vmatpush1.msra.mxu0 %v229
    %327 = vmatprep.subr.mxu0 0.0
    %328 = vmatpush1.msra.mxu0 %v230
    %329 = vmatprep.subr.mxu0 0.0
    %330 = vmatpush1.msra.mxu0 %v231
    %331 = vmatprep.subr.mxu0 0.0
    %332 = vmatpush1.msra.mxu0 %v232
    %333 = vmatprep.subr.mxu0 0.0
    %334 = vmatpush1.msra.mxu0 %v233
    %335 = vmatprep.subr.mxu0 0.0
    %336 = vmatpush1.msra.mxu0 %v234
    %337 = vmatprep.subr.mxu0 0.0
    %338 = vmatpush1.msra.mxu0 %v235
    %339 = vmatprep.mubr.f32.mxu0 %v201
    %340 = vmatmul.mubr.f32.gmra.mrb[0].mxu0 %v200
    %v341 = vpop.f32.mrb[0].mxu0
    %v342 = vadd.f32 %v273, %v341
    %v343 = vpop.f32.mrb[0].mxu0
    %344 = vdwg.mxu0
    %345 = vmatprep.subr.mxu0 0.0
    %346 = vmatpush1.msra.mxu0 %v236
    %347 = vmatprep.subr.mxu0 0.0
    %348 = vmatpush1.msra.mxu0 %v237
    %349 = vmatprep.subr.mxu0 0.0
    %350 = vmatpush1.msra.mxu0 %v238
    %351 = vmatprep.subr.mxu0 0.0
    %352 = vmatpush1.msra.mxu0 %v239
    %353 = vmatprep.subr.mxu0 0.0
    %354 = vmatpush1.msra.mxu0 %v240
    %355 = vmatprep.subr.mxu0 0.0
    %356 = vmatpush1.msra.mxu0 %v241
    %357 = vmatprep.subr.mxu0 0.0
    %358 = vmatpush1.msra.mxu0 %v242
    %359 = vmatprep.subr.mxu0 0.0
    %360 = vmatpush1.msra.mxu0 %v243
    %361 = vmatprep.subr.mxu0 0.0
    %362 = vmatpush1.msra.mxu0 %v244
    %363 = vmatprep.subr.mxu0 0.0
    %364 = vmatpush1.msra.mxu0 %v245
    %365 = vmatprep.subr.mxu0 0.0
    %366 = vmatpush1.msra.mxu0 %v246
    %367 = vmatprep.subr.mxu0 0.0
    %368 = vmatpush1.msra.mxu0 %v247
    %369 = vmatprep.subr.mxu0 0.0
    %370 = vmatpush1.msra.mxu0 %v248
    %371 = vmatprep.subr.mxu0 0.0
    %372 = vmatpush1.msra.mxu0 %v249
    %373 = vmatprep.subr.mxu0 0.0
    %374 = vmatpush1.msra.mxu0 %v250
    %375 = vmatprep.subr.mxu0 0.0
    %376 = vmatpush1.msra.mxu0 %v251
    %377 = vmatprep.subr.mxu0 0.0
    %378 = vmatpush1.msra.mxu0 %v252
    %379 = vmatprep.subr.mxu0 0.0
    %380 = vmatpush1.msra.mxu0 %v253
    %381 = vmatprep.subr.mxu0 0.0
    %382 = vmatpush1.msra.mxu0 %v254
    %383 = vmatprep.subr.mxu0 0.0
    %384 = vmatpush1.msra.mxu0 %v255
    %385 = vmatprep.subr.mxu0 0.0
    %386 = vmatpush1.msra.mxu0 %v256
    %387 = vmatprep.subr.mxu0 0.0
    %388 = vmatpush1.msra.mxu0 %v257
    %389 = vmatprep.subr.mxu0 0.0
    %390 = vmatpush1.msra.mxu0 %v258
    %391 = vmatprep.subr.mxu0 0.0
    %392 = vmatpush1.msra.mxu0 %v259
    %393 = vmatprep.subr.mxu0 0.0
    %394 = vmatpush1.msra.mxu0 %v260
    %395 = vmatprep.subr.mxu0 0.0
    %396 = vmatpush1.msra.mxu0 %v261
    %397 = vmatprep.subr.mxu0 0.0
    %398 = vmatpush1.msra.mxu0 %v262
    %399 = vmatprep.subr.mxu0 0.0
    %400 = vmatpush1.msra.mxu0 %v263
    %401 = vmatprep.subr.mxu0 0.0
    %402 = vmatpush1.msra.mxu0 %v264
    %403 = vmatprep.subr.mxu0 0.0
    %404 = vmatpush1.msra.mxu0 %v265
    %405 = vmatprep.subr.mxu0 0.0
    %406 = vmatpush1.msra.mxu0 %v266
    %407 = vmatprep.subr.mxu0 0.0
    %408 = vmatpush1.msra.mxu0 %v267
    %409 = vmatprep.mubr.f32.mxu0 %v203
    %410 = vmatmul.mubr.f32.gmra.mrb[0].mxu0 %v202
    %v411 = vpop.f32.mrb[0].mxu0
    %v412 = vadd.f32 %v342, %v411
    %v413 = vpop.f32.mrb[0].mxu0
    %414 = vdwg.mxu0
    %v415 = vmax.f32 %v412, 0.0
    %v416 = vld [vmem:[%s5] sm:$0xff]
    %v417 = vld [vmem:[%s5 + $0x8] sm:$0xff]
    %v418 = vld [vmem:[%s5 + $0x10] sm:$0xff]
    %v419 = vld [vmem:[%s5 + $0x18] sm:$0xff]
    %v420 = vld [vmem:[%s5 + $0x20] sm:$0xff]
    %v421 = vld [vmem:[%s5 + $0x28] sm:$0xff]
    %v422 = vld [vmem:[%s5 + $0x30] sm:$0xff]
    %v423 = vld [vmem:[%s5 + $0x38] sm:$0xff]
    %v424 = vld [vmem:[%s6] sm:$0x1]
    %v426 = vlaneseq
    %v427 = vshrl.u32 %v426, 7
    %v428 = vsub.s32 0, %v427
    %v429 = vrot.slane %v424, %v428
    %vm431 = vcmask 523264
    %v433 = vsel %vm431, %v415, 0
    %435 = vmatprep.subr.mxu0 0.0
    %436 = vmatpush1.msra.mxu0 %v416
    %437 = vmatprep.subr.mxu0 0.0
    %438 = vmatpush1.msra.mxu0 %v417
    %439 = vmatprep.subr.mxu0 0.0
    %440 = vmatpush1.msra.mxu0 %v418
    %441 = vmatprep.subr.mxu0 0.0
    %442 = vmatpush1.msra.mxu0 %v419
    %443 = vmatprep.subr.mxu0 0.0
    %444 = vmatpush1.msra.mxu0 %v420
    %445 = vmatprep.subr.mxu0 0.0
    %446 = vmatpush1.msra.mxu0 %v421
    %447 = vmatprep.subr.mxu0 0.0
    %448 = vmatpush1.msra.mxu0 %v422
    %449 = vmatprep.subr.mxu0 0.0
    %450 = vmatpush1.msra.mxu0 %v423
    %451 = vmatprep.subr.mxu0 0.0
    %452 = vmatpush1.msra.mxu0 0.0
    %453 = vmatprep.subr.mxu0 0.0
    %454 = vmatpush1.msra.mxu0 0.0
    %455 = vmatprep.subr.mxu0 0.0
    %456 = vmatpush1.msra.mxu0 0.0
    %457 = vmatprep.subr.mxu0 0.0
    %458 = vmatpush1.msra.mxu0 0.0
    %459 = vmatprep.subr.mxu0 0.0
    %460 = vmatpush1.msra.mxu0 0.0
    %461 = vmatprep.subr.mxu0 0.0
    %462 = vmatpush1.msra.mxu0 0.0
    %463 = vmatprep.subr.mxu0 0.0
    %464 = vmatpush1.msra.mxu0 0.0
    %465 = vmatprep.subr.mxu0 0.0
    %466 = vmatpush1.msra.mxu0 0.0
    %467 = vmatprep.subr.mxu0 0.0
    %468 = vmatpush1.msra.mxu0 0.0
    %469 = vmatprep.subr.mxu0 0.0
    %470 = vmatpush1.msra.mxu0 0.0
    %471 = vmatprep.subr.mxu0 0.0
    %472 = vmatpush1.msra.mxu0 0.0
    %473 = vmatprep.subr.mxu0 0.0
    %474 = vmatpush1.msra.mxu0 0.0
    %475 = vmatprep.subr.mxu0 0.0
    %476 = vmatpush1.msra.mxu0 0.0
    %477 = vmatprep.subr.mxu0 0.0
    %478 = vmatpush1.msra.mxu0 0.0
    %479 = vmatprep.subr.mxu0 0.0
    %480 = vmatpush1.msra.mxu0 0.0
    %481 = vmatprep.subr.mxu0 0.0
    %482 = vmatpush1.msra.mxu0 0.0
    %483 = vmatprep.subr.mxu0 0.0
    %484 = vmatpush1.msra.mxu0 0.0
    %485 = vmatprep.subr.mxu0 0.0
    %486 = vmatpush1.msra.mxu0 0.0
    %487 = vmatprep.subr.mxu0 0.0
    %488 = vmatpush1.msra.mxu0 0.0
    %489 = vmatprep.subr.mxu0 0.0
    %490 = vmatpush1.msra.mxu0 0.0
    %491 = vmatprep.subr.mxu0 0.0
    %492 = vmatpush1.msra.mxu0 0.0
    %493 = vmatprep.subr.mxu0 0.0
    %494 = vmatpush1.msra.mxu0 0.0
    %495 = vmatprep.subr.mxu0 0.0
    %496 = vmatpush1.msra.mxu0 0.0
    %497 = vmatprep.subr.mxu0 0.0
    %498 = vmatpush1.msra.mxu0 0.0
    %499 = vmatprep.mubr.f32.mxu0 0.0
    %500 = vmatmul.mubr.f32.gmra.mrb[0].mxu0 %v433
    %v501 = vpop.f32.mrb[0].mxu0
    %v502 = vadd.f32 %v429, %v501
    %v503 = vpop.f32.mrb[0].mxu0
    %504 = vdwg.mxu0
    %vm505 = vcmask 1041408
    %v506 = vsel %vm505, %v502, -inf
    %507 = vmax.xlane.f32.xlu0 %v506
    %v508 = vpop.xlane.xlu0 %507
    %v509 = vsub.f32 %v502, %v508
    %v510 = vmul.f32 %v509, 1.442695
    %v511 = vpow.pop %v510
    %v512 = vsel %vm505, %v511, 0.0
    %513 = vadd.xlane.f32.xlu0 %v512
    %v514 = vpop.xlane.xlu0 %513
    %v515 = vrcp.pop %v514
    %v516 = vmul.f32 %v511, %v515
    %517 = vst [vmem:[#allocation2] sm:$0x3] %v516
    // Predicated region
    $region30: #{tpu_custom_call.1} parent=1 // pred_check
      _
    $region31: #{tpu_custom_call.1} parent=1 // pred_check_branch
      %519 = sbr.rel (0) target = $region33
    $region32: #{tpu_custom_call.1} parent=1 // pred_region
      %s521 = ssub.s32 32, 32
      %522 = vsyncadd [#allocation3], %s521
      %s524 = sshll.u32 [#allocation2], 4
      %s525 = int_to_ptr.vmem [resolvable:$true] %s524
      %527 = dma.vmem_to_hbm [thread:$0]  %s525, 32, %s7, [#allocation3]
    $region33: #{tpu_custom_call.1} parent=1 // pred_fallthru
      _
    // Predicated region
    $region34: #{tpu_custom_call.1} parent=1 // pred_check
      _
    $region35: #{tpu_custom_call.1} parent=1 // pred_check_branch
      %529 = sbr.rel (0) target = $region37
    $region36: #{tpu_custom_call.1} parent=1 // pred_region
      %530 = dma.done [#allocation3], 32
    $region37: #{tpu_custom_call.1} parent=1 // pred_fallthru
      _
    %531 = vsyncpa [#allocation3], 1

</llo_original>
